<compile_context>
chip_gen: v7x
topology: tpu7x:2x2x1
jax: 0.10.0
libtpu: 0.0.40
codegen_flags: <defaults>
</compile_context>

<pallas_src>
import functools

import jax
import jax.numpy as jnp
from jax.experimental import pallas as pl
from jax.experimental.pallas import tpu as pltpu


def _frame_shift_kernel(shift_ref, x_ref, o_ref, *, block_batch):
    """Roll each (F, T) sample in the block by its own shift along the lane (T) axis."""
    base = pl.program_id(0) * block_batch
    # block_batch is small & static -> unrolled; each roll is XLU data movement only
    # (no MXU, no O(T^2) VPU work).
    for i in range(block_batch):
        s = shift_ref[base + i]                 # int32 in [0, T), read from SMEM
        o_ref[i] = pltpu.roll(x_ref[i], s, 1)   # == jnp.roll(x[i], s, axis=-1)


def _pick_block_batch(batch, target=8):
    """Largest divisor of `batch` that is <= target, so the grid tiles evenly."""
    bt = min(batch, target)
    while batch % bt:
        bt -= 1
    return max(bt, 1)


def roll_features(xs, shifts):
    """out[b] = roll(xs[b], shifts[b], axis=-1) for xs of shape (B, F, T)."""
    B, F, T = xs.shape
    bt = _pick_block_batch(B)
    feat_shift = jnp.mod(shifts, T).astype(jnp.int32)   # non-negative shift in [0, T)
    kernel = functools.partial(_frame_shift_kernel, block_batch=bt)
    return pl.pallas_call(
        kernel,
        out_shape=jax.ShapeDtypeStruct(xs.shape, xs.dtype),
        grid_spec=pltpu.PrefetchScalarGridSpec(
            num_scalar_prefetch=1,
            grid=(B // bt,),
            in_specs=[pl.BlockSpec((bt, F, T), lambda b, s_ref: (b, 0, 0))],
            out_specs=pl.BlockSpec((bt, F, T), lambda b, s_ref: (b, 0, 0)),
        ),
        compiler_params=pltpu.CompilerParams(dimension_semantics=("parallel",)),
        # Indices count the scalar-prefetch operand: 0 = feat_shift, 1 = xs.
        input_output_aliases={1: 0},
    )(feat_shift, xs)


def _sample_shifts(key, batch_size):
    # Mirrors int(random.gauss(0, 90)): gaussian std 90, truncated toward zero.
    return (jax.random.normal(key, (batch_size,)) * 90.0).astype(jnp.int32)


class FrameShiftAugmentation:
    """JAX/Pallas port of the PyTorch FrameShiftAugmentation module."""

    def __init__(self, net_pooling=None):
        self.net_pooling = net_pooling

    def __call__(self, x, labels=None, *, key):
        B, _, F, T = x.shape
        xs = x[:, 0]                                 # == x.squeeze(1)
        shifts = _sample_shifts(key, B)              # per-sample frame shift
        xo = roll_features(xs, shifts)

        if labels is None:
            return xo[:, None]                       # unsqueeze(1)

        # -abs(shift)//p if shift<0 else shift//p  ==  floor(shift / p)
        lab_shift = jnp.floor_divide(shifts, self.net_pooling)
        # Lane-sparse (T_lab < 128) and tiny: roll in plain JAX per perf review.
        labo = jax.vmap(lambda lab, s: jnp.roll(lab, s, axis=-1))(labels, lab_shift)
        return xo[:, None], labo                     # (x.unsqueeze(1), labels)


if __name__ == "__main__":
    key = jax.random.PRNGKey(0)
    kx, klab, kshift = jax.random.split(key, 3)

    B, F, T = 2, 16, 128
    net_pooling = 4
    C_lab, T_lab = 8, T // net_pooling

    x = jax.random.normal(kx, (B, 1, F, T), dtype=jnp.float32)
    labels = (jax.random.uniform(klab, (B, C_lab, T_lab)) > 0.5).astype(jnp.float32)

    # Reference (same shift sampling), computed up front against jnp.roll.
    shifts = _sample_shifts(kshift, B)
    lab_shifts = jnp.floor_divide(shifts, net_pooling)
    exp_x = jnp.stack([jnp.roll(x[i, 0], int(shifts[i]), axis=-1) for i in range(B)])[:, None]
    exp_lab = jnp.stack([jnp.roll(labels[i], int(lab_shifts[i]), axis=-1) for i in range(B)])

    aug = FrameShiftAugmentation(net_pooling=net_pooling)

    x_out, lab_out = aug(x, labels, key=kshift)
    x_out = jax.block_until_ready(x_out)
    lab_out = jax.block_until_ready(lab_out)

    x_only = aug(x, key=kshift)
    x_only = jax.block_until_ready(x_only)

    assert x_out.shape == (B, 1, F, T) and lab_out.shape == (B, C_lab, T_lab)
    assert jnp.array_equal(x_out, exp_x), "feature roll mismatch"
    assert jnp.array_equal(lab_out, exp_lab), "label roll mismatch"
    assert jnp.array_equal(x_only, exp_x), "feature roll (no-label path) mismatch"

    print("KERNEL_OK")
</pallas_src>

<mosaic_0001>
module attributes {stable_mosaic.version = 11 : i64} {
  func.func @_frame_shift_kernel(%arg0: i32, %arg1: memref<2xi32, #tpu.memory_space<smem>>, %arg2: memref<2x16x128xf32, #tpu.memory_space<vmem>>, %arg3: memref<2x16x128xf32, #tpu.memory_space<vmem>>) attributes {dimension_semantics = [#tpu.dimension_semantics<parallel>], iteration_bounds = array<i64: 1>, scalar_prefetch = 1 : i64, scratch_operands = 0 : i64, tpu.core_type = #tpu.core_type<tc>, window_params = [{transform_indices = @transform_0, window_bounds = array<i64: 2, 16, 128>}, {transform_indices = @transform_1, window_bounds = array<i64: 2, 16, 128>}]} {
    %c2_i32 = arith.constant 2 : i32
    %0 = arith.muli %arg0, %c2_i32 : i32
    %c0_i32 = arith.constant 0 : i32
    %1 = arith.addi %0, %c0_i32 : i32
    %2 = arith.index_cast %1 : i32 to index
    %3 = memref.load %arg1[%2] : memref<2xi32, #tpu.memory_space<smem>>
    %c0 = arith.constant 0 : index
    %c0_0 = arith.constant 0 : index
    %c0_1 = arith.constant 0 : index
    %4 = vector.load %arg2[%c0, %c0_0, %c0_1] : memref<2x16x128xf32, #tpu.memory_space<vmem>>, vector<1x16x128xf32>
    %5 = vector.shape_cast %4 : vector<1x16x128xf32> to vector<16x128xf32>
    %6 = tpu.dynamic_rotate %5 by %3 dim 1 : vector<16x128xf32>, i32 -> vector<16x128xf32>
    %c0_2 = arith.constant 0 : index
    %c0_3 = arith.constant 0 : index
    %c0_4 = arith.constant 0 : index
    %7 = vector.load %arg3[%c0_2, %c0_3, %c0_4] : memref<2x16x128xf32, #tpu.memory_space<vmem>>, vector<1x16x128xf32>
    %8 = vector.shape_cast %7 : vector<1x16x128xf32> to vector<16x128xf32>
    %9 = vector.shape_cast %6 : vector<16x128xf32> to vector<1x16x128xf32>
    tpu.vector_store %arg3[%c0_2, %c0_3, %c0_4], %9 {strides = array<i32>} : memref<2x16x128xf32, #tpu.memory_space<vmem>>, vector<1x16x128xf32>,
    %c1_i32 = arith.constant 1 : i32
    %10 = arith.addi %0, %c1_i32 : i32
    %11 = arith.index_cast %10 : i32 to index
    %12 = memref.load %arg1[%11] : memref<2xi32, #tpu.memory_space<smem>>
    %c1 = arith.constant 1 : index
    %c0_5 = arith.constant 0 : index
    %c0_6 = arith.constant 0 : index
    %13 = vector.load %arg2[%c1, %c0_5, %c0_6] : memref<2x16x128xf32, #tpu.memory_space<vmem>>, vector<1x16x128xf32>
    %14 = vector.shape_cast %13 : vector<1x16x128xf32> to vector<16x128xf32>
    %15 = tpu.dynamic_rotate %14 by %12 dim 1 : vector<16x128xf32>, i32 -> vector<16x128xf32>
    %c1_7 = arith.constant 1 : index
    %c0_8 = arith.constant 0 : index
    %c0_9 = arith.constant 0 : index
    %16 = vector.load %arg3[%c1_7, %c0_8, %c0_9] : memref<2x16x128xf32, #tpu.memory_space<vmem>>, vector<1x16x128xf32>
    %17 = vector.shape_cast %16 : vector<1x16x128xf32> to vector<16x128xf32>
    %18 = vector.shape_cast %15 : vector<16x128xf32> to vector<1x16x128xf32>
    tpu.vector_store %arg3[%c1_7, %c0_8, %c0_9], %18 {strides = array<i32>} : memref<2x16x128xf32, #tpu.memory_space<vmem>>, vector<1x16x128xf32>,
    return
  }
  func.func @transform_0(%arg0: i32, %arg1: memref<2xi32, #tpu.memory_space<smem>>) -> (i32, i32, i32) {
    %c0_i32 = arith.constant 0 : i32
    %c0_i32_0 = arith.constant 0 : i32
    %c0_i32_1 = arith.constant 0 : i32
    return %arg0, %c0_i32, %c0_i32_0 : i32, i32, i32
  }
  func.func @transform_1(%arg0: i32, %arg1: memref<2xi32, #tpu.memory_space<smem>>) -> (i32, i32, i32) {
    %c0_i32 = arith.constant 0 : i32
    %c0_i32_0 = arith.constant 0 : i32
    %c0_i32_1 = arith.constant 0 : i32
    return %arg0, %c0_i32, %c0_i32_0 : i32, i32, i32
  }
}

</mosaic_0001>

<llo_original>
// kernel: tpu_custom_call.1
$region0: #{tpu_custom_call.1}
  #allocation0 [shape = 'u32[]', space=smem, size = 0x4, offset = 0x4, fixed_abs, tag = 'smem constant byte address 0x4 - core index']
  #allocation1 [shape = 'u32[144,128]{1,0:T(1,128)}', space=vmem, size = 0x12000, scoped, tag = 'internal scratch']
  #allocation2 [shape = 's32[1]{0}', space=sflag, size = 0x4, scoped, tag = 'scoped memory for tpu_custom_call.1']
  #allocation3 [shape = 'u8[512]{0}', space=smem, size = 0x200, scoped, tag = 'prefetched SMEM operand 0']
  %s0 = inlined_call_operand.vmem [shape: s32[2], index: 0, kind: input, shape index: {}]
  %s1 = inlined_call_operand.hbm [shape: f32[2,16,128], index: 1, kind: input, shape index: {}, may-alias: {1,2}]
  %s2 = inlined_call_operand.hbm [shape: f32[2,16,128], index: 2, kind: output, shape index: {}, may-alias: {1,2}]
  %s3 = sld [smem:[#allocation0]]
  $region18: #{tpu_custom_call.1} parent=0
    _
  %s5 = ssub.s32 1, %s3
  %s6 = scalar_select 0, %s5, %s3
  %s7 = sshll.u32 %s0, 4
  %s8 = int_to_ptr.vmem [resolvable:$true] %s7
  %10 = dma.vmem_to_smem %s8, 16, [#allocation3], [#allocation2]
  %11 = dma.done [#allocation2], 16
  %12 = sfence
  $region1: #{tpu_custom_call.1} parent=0
    #allocation4 [shape = 'u8[16384]{0}', space=vmem, size = 0x4000, scoped, tag = 'input window, operand 1, single buffered']
    #allocation5 [shape = 's32[1]{0}', space=sflag, size = 0x4, scoped, tag = 'scoped memory for tpu_custom_call.1']
    #allocation6 [shape = 's32[1]{0}', space=sflag, size = 0x4, scoped, tag = 'scoped memory for tpu_custom_call.1']
    #allocation7 [shape = 'u8[16384]{0}', space=vmem, size = 0x4000, scoped, tag = 'output window, operand 0, single buffered']
    %13 = vsyncpa [#allocation5], 0
    %14 = vsyncpa [#allocation6], 0
    // Predicated region
    $region2: #{tpu_custom_call.1} parent=1 // pred_check
      _
    $region3: #{tpu_custom_call.1} parent=1 // pred_check_branch
      %16 = sbr.rel (0) target = $region5
    $region4: #{tpu_custom_call.1} parent=1 // pred_region
      %s18 = ssub.s32 512, 512
      %19 = vsyncadd [#allocation5], %s18
      %s20 = sshll.u32 [#allocation4], 4
      %s21 = int_to_ptr.vmem [resolvable:$true] %s20
      %26 = dma.hbm_to_vmem [thread:$0]  %s1, 512, %s21, [#allocation5], 128, 128, 8
    $region5: #{tpu_custom_call.1} parent=1 // pred_fallthru
      _
    // Predicated region
    $region6: #{tpu_custom_call.1} parent=1 // pred_check
      _
    $region7: #{tpu_custom_call.1} parent=1 // pred_check_branch
      %28 = sbr.rel (0) target = $region9
    $region8: #{tpu_custom_call.1} parent=1 // pred_region
      %29 = dma.done [#allocation5], 512
    $region9: #{tpu_custom_call.1} parent=1 // pred_fallthru
      _
    %s30 = smul.u32 0, 2
    %s31 = sld [smem:[#allocation3 + %s30]]
    %v32 = vld [vmem:[#allocation4] sm:$0xff]
    %v33 = vld [vmem:[#allocation4 + $0x8] sm:$0xff]
    %s34 = sand.u32 %s31, 127
    %s35 = sand.u32 %s34, 127
    %36 = vrot.lane.b32.xlu0 %v32, %s35
    %v37 = vpop.permute.xlu0 %36
    %38 = vrot.lane.b32.xlu0 %v33, %s35
    %v39 = vpop.permute.xlu0 %38
    %40 = vst [vmem:[#allocation7] sm:$0xff] %v37
    %41 = vst [vmem:[#allocation7 + $0x8] sm:$0xff] %v39
    %s42 = sadd.s32 %s30, 1
    %s43 = sld [smem:[#allocation3 + %s42]]
    %s44 = scalar_lea.vmem [#allocation4], 16
    %v45 = vld [vmem:[%s44] sm:$0xff]
    %v46 = vld [vmem:[%s44 + $0x8] sm:$0xff]
    %s47 = sand.u32 %s43, 127
    %s48 = sand.u32 %s47, 127
    %49 = vrot.lane.b32.xlu0 %v45, %s48
    %v50 = vpop.permute.xlu0 %49
    %51 = vrot.lane.b32.xlu0 %v46, %s48
    %v52 = vpop.permute.xlu0 %51
    %s53 = scalar_lea.vmem [#allocation7], 16
    %54 = vst [vmem:[%s53] sm:$0xff] %v50
    %55 = vst [vmem:[%s53 + $0x8] sm:$0xff] %v52
    // Predicated region
    $region10: #{tpu_custom_call.1} parent=1 // pred_check
      _
    $region11: #{tpu_custom_call.1} parent=1 // pred_check_branch
      %57 = sbr.rel (0) target = $region13
    $region12: #{tpu_custom_call.1} parent=1 // pred_region
      %s59 = ssub.s32 512, 512
      %60 = vsyncadd [#allocation6], %s59
      %s61 = sshll.u32 [#allocation7], 4
      %s62 = int_to_ptr.vmem [resolvable:$true] %s61
      %67 = dma.vmem_to_hbm [thread:$0]  %s62, 512, %s2, [#allocation6], 128, 128, 8
    $region13: #{tpu_custom_call.1} parent=1 // pred_fallthru
      _
    // Predicated region
    $region14: #{tpu_custom_call.1} parent=1 // pred_check
      _
    $region15: #{tpu_custom_call.1} parent=1 // pred_check_branch
      %69 = sbr.rel (0) target = $region17
    $region16: #{tpu_custom_call.1} parent=1 // pred_region
      %70 = dma.done [#allocation6], 512
    $region17: #{tpu_custom_call.1} parent=1 // pred_fallthru
      _
    %71 = vsyncpa [#allocation5], 1
    %72 = vsyncpa [#allocation6], 1

</llo_original>
